<compile_context>
chip_gen: v5e
topology: v5e:2x2
jax: 0.10.0
libtpu: 0.0.40
codegen_flags: <defaults>
</compile_context>

<pallas_src>
import functools

import jax
import jax.numpy as jnp
from jax import lax
from jax.experimental import pallas as pl
from jax.experimental.pallas import tpu as pltpu


def _attention_kernel(q_ref, k_ref, v_ref,
                      wq_ref, wk_ref, wv_ref, wp_ref, bp_ref,
                      o_ref, *, num_heads):
    cdt = q_ref.dtype                       # MXU compute dtype (e.g. bf16)
    q = q_ref[...]                          # (TN, C)
    k = k_ref[...]                          # (M,  C)
    v = v_ref[...]                          # (M,  C)

    tn = q.shape[0]
    c_out = o_ref.shape[-1]                 # lane-dense padded output width
    acc = jnp.zeros((tn, c_out), jnp.float32)

    for h in range(num_heads):              # static unroll; only leading-axis
        wq_h = wq_ref[h]                    # (C, hd)   (scale pre-folded)
        wk_h = wk_ref[h]                    # (C, hd)
        wv_h = wv_ref[h]                    # (C, hd)
        wp_h = wp_ref[h]                    # (hd, Cp)

        # Per-head projections: native-dtype operands, f32 accumulation.
        qh = jnp.dot(q, wq_h, preferred_element_type=jnp.float32).astype(cdt)
        kh = jnp.dot(k, wk_h, preferred_element_type=jnp.float32).astype(cdt)
        vh = jnp.dot(v, wv_h, preferred_element_type=jnp.float32).astype(cdt)

        # Scores: q . k^T via dot_general (transpose folded into MXU feed).
        s = lax.dot_general(qh, kh, (((1,), (1,)), ((), ())),
                            preferred_element_type=jnp.float32)      # (TN, M)

        # Softmax (f32 math); normalize the small (TN, hd) context instead of
        # the (TN, M) probabilities, using the EUP reciprocal.
        s = s - jnp.max(s, axis=-1, keepdims=True)
        p = jnp.exp(s)
        l = jnp.sum(p, axis=-1, keepdims=True)                       # (TN, 1)

        ctx = jnp.dot(p.astype(cdt), vh,
                      preferred_element_type=jnp.float32)            # (TN, hd)
        ctx = ctx * pl.reciprocal(l, approx=True)

        # Output-projection contribution of this head (== concat + matmul).
        acc = acc + jnp.dot(ctx.astype(cdt), wp_h,
                            preferred_element_type=jnp.float32)      # (TN, Cp)

    o_ref[...] = (acc + bp_ref[...]).astype(o_ref.dtype)


def attention_pallas(q, k, v, params, *, num_heads, scale,
                     compute_dtype=jnp.bfloat16, block_n=256):
    """q: (B,N,C), k/v: (B,M,C). params: PyTorch-layout weights."""
    B, N, C = q.shape
    _, M, _ = k.shape
    assert k.shape == v.shape
    assert C % num_heads == 0
    hd = C // num_heads
    out_dtype = q.dtype

    # Lane-dense output: pad the projection output channels to a 128 multiple.
    c_pad = ((C + 127) // 128) * 128

    # PyTorch nn.Linear weight is (out, in); transpose to (in, out), fold the
    # attention scale into wq, and split heads on the LEADING axis so the
    # kernel never slices along the lane dim.
    wq_h = (params["wq"].T * scale).reshape(C, num_heads, hd).transpose(1, 0, 2)
    wk_h = params["wk"].T.reshape(C, num_heads, hd).transpose(1, 0, 2)
    wv_h = params["wv"].T.reshape(C, num_heads, hd).transpose(1, 0, 2)
    wp_t = jnp.pad(params["wp"].T, ((0, 0), (0, c_pad - C)))           # (C, Cp)
    wp_h = wp_t.reshape(num_heads, hd, c_pad)                          # (H, hd, Cp)
    bp = jnp.pad(params["bp"], (0, c_pad - C)).reshape(1, c_pad).astype(jnp.float32)

    # Feed the MXU its native dtype (bf16 by default); accumulation is f32.
    qc = q.astype(compute_dtype)
    kc = k.astype(compute_dtype)
    vc = v.astype(compute_dtype)
    wq_h = wq_h.astype(compute_dtype)
    wk_h = wk_h.astype(compute_dtype)
    wv_h = wv_h.astype(compute_dtype)
    wp_h = wp_h.astype(compute_dtype)

    tn = N if N <= block_n else block_n
    grid_n = pl.cdiv(N, tn)

    kernel = functools.partial(_attention_kernel, num_heads=num_heads)

    out = pl.pallas_call(
        kernel,
        out_shape=jax.ShapeDtypeStruct((B, N, c_pad), out_dtype),
        grid_spec=pltpu.PrefetchScalarGridSpec(
            num_scalar_prefetch=0,
            grid=(B, grid_n),
            in_specs=[
                pl.BlockSpec((None, tn, C), lambda b, n: (b, n, 0)),        # q
                pl.BlockSpec((None, M, C), lambda b, n: (b, 0, 0)),         # k
                pl.BlockSpec((None, M, C), lambda b, n: (b, 0, 0)),         # v
                pl.BlockSpec((num_heads, C, hd), lambda b, n: (0, 0, 0)),   # wq*scale
                pl.BlockSpec((num_heads, C, hd), lambda b, n: (0, 0, 0)),   # wk
                pl.BlockSpec((num_heads, C, hd), lambda b, n: (0, 0, 0)),   # wv
                pl.BlockSpec((num_heads, hd, c_pad), lambda b, n: (0, 0, 0)),  # wp
                pl.BlockSpec((1, c_pad), lambda b, n: (0, 0)),              # bias
            ],
            out_specs=pl.BlockSpec((None, tn, c_pad), lambda b, n: (b, n, 0)),
        ),
        compiler_params=pltpu.CompilerParams(
            dimension_semantics=("parallel", "parallel")),
    )(qc, kc, vc, wq_h, wk_h, wv_h, wp_h, bp)

    return out[..., :C] if c_pad != C else out


def attention_reference(q, k, v, params, *, num_heads, scale):
    """Pure-JAX f32 reference matching the PyTorch forward exactly."""
    B, N, C = q.shape
    _, M, _ = k.shape
    hd = C // num_heads
    qp = (q @ params["wq"].T).reshape(B, N, num_heads, hd)
    kp = (k @ params["wk"].T).reshape(B, M, num_heads, hd)
    vp = (v @ params["wv"].T).reshape(B, M, num_heads, hd)
    attn = jnp.einsum("bnkc,bmkc->bknm", qp, kp) * scale
    attn = jax.nn.softmax(attn, axis=-1)
    x = jnp.einsum("bknm,bmkc->bnkc", attn, vp).reshape(B, N, C)
    x = x @ params["wp"].T + params["bp"]
    return x


if __name__ == "__main__":
    B, N, M = 2, 8, 8
    dim = 32
    num_heads = 4
    head_dim = dim // num_heads
    scale = head_dim ** (-0.5)

    key = jax.random.PRNGKey(0)
    k_q, k_k, k_v, k_wq, k_wk, k_wv, k_wp, k_bp = jax.random.split(key, 8)

    q = jax.random.normal(k_q, (B, N, dim), dtype=jnp.float32)
    k = jax.random.normal(k_k, (B, M, dim), dtype=jnp.float32)
    v = jax.random.normal(k_v, (B, M, dim), dtype=jnp.float32)

    # qkv projections: no bias (qkv_bias=False); output proj: with bias.
    params = {
        "wq": jax.random.normal(k_wq, (dim, dim), dtype=jnp.float32) * 0.1,
        "wk": jax.random.normal(k_wk, (dim, dim), dtype=jnp.float32) * 0.1,
        "wv": jax.random.normal(k_wv, (dim, dim), dtype=jnp.float32) * 0.1,
        "wp": jax.random.normal(k_wp, (dim, dim), dtype=jnp.float32) * 0.1,
        "bp": jax.random.normal(k_bp, (dim,), dtype=jnp.float32) * 0.1,
    }

    out = attention_pallas(q, k, v, params, num_heads=num_heads, scale=scale)
    out = jax.block_until_ready(out)

    ref = attention_reference(q, k, v, params, num_heads=num_heads, scale=scale)
    assert out.shape == (B, N, dim)
    # bf16 MXU operands + approximate reciprocal -> slightly looser tolerance.
    assert jnp.allclose(out, ref, atol=2e-2, rtol=2e-2), "mismatch vs reference"

    print("KERNEL_OK")
</pallas_src>

<mosaic_0001>
module attributes {stable_mosaic.version = 11 : i64} {
  func.func @_attention_kernel(%arg0: i32, %arg1: i32, %arg2: memref<1x8x32xbf16, #tpu.memory_space<vmem>>, %arg3: memref<1x8x32xbf16, #tpu.memory_space<vmem>>, %arg4: memref<1x8x32xbf16, #tpu.memory_space<vmem>>, %arg5: memref<4x32x8xbf16, #tpu.memory_space<vmem>>, %arg6: memref<4x32x8xbf16, #tpu.memory_space<vmem>>, %arg7: memref<4x32x8xbf16, #tpu.memory_space<vmem>>, %arg8: memref<4x8x128xbf16, #tpu.memory_space<vmem>>, %arg9: memref<1x128xf32, #tpu.memory_space<vmem>>, %arg10: memref<1x8x128xf32, #tpu.memory_space<vmem>>) attributes {dimension_semantics = [#tpu.dimension_semantics<parallel>, #tpu.dimension_semantics<parallel>], iteration_bounds = array<i64: 2, 1>, scalar_prefetch = 0 : i64, scratch_operands = 0 : i64, tpu.core_type = #tpu.core_type<tc>, window_params = [{transform_indices = @transform_0, window_bounds = array<i64: 1, 8, 32>}, {transform_indices = @transform_1, window_bounds = array<i64: 1, 8, 32>}, {transform_indices = @transform_2, window_bounds = array<i64: 1, 8, 32>}, {pipeline_mode = #tpu.pipeline_mode<synchronous>, transform_indices = @transform_3, window_bounds = array<i64: 4, 32, 8>}, {pipeline_mode = #tpu.pipeline_mode<synchronous>, transform_indices = @transform_4, window_bounds = array<i64: 4, 32, 8>}, {pipeline_mode = #tpu.pipeline_mode<synchronous>, transform_indices = @transform_5, window_bounds = array<i64: 4, 32, 8>}, {pipeline_mode = #tpu.pipeline_mode<synchronous>, transform_indices = @transform_6, window_bounds = array<i64: 4, 8, 128>}, {pipeline_mode = #tpu.pipeline_mode<synchronous>, transform_indices = @transform_7, window_bounds = array<i64: 1, 128>}, {transform_indices = @transform_8, window_bounds = array<i64: 1, 8, 128>}]} {
    %c0 = arith.constant 0 : index
    %c0_0 = arith.constant 0 : index
    %c0_1 = arith.constant 0 : index
    %0 = vector.load %arg2[%c0, %c0_0, %c0_1] : memref<1x8x32xbf16, #tpu.memory_space<vmem>>, vector<1x8x32xbf16>
    %1 = vector.shape_cast %0 : vector<1x8x32xbf16> to vector<8x32xbf16>
    %c0_2 = arith.constant 0 : index
    %c0_3 = arith.constant 0 : index
    %c0_4 = arith.constant 0 : index
    %2 = vector.load %arg3[%c0_2, %c0_3, %c0_4] : memref<1x8x32xbf16, #tpu.memory_space<vmem>>, vector<1x8x32xbf16>
    %3 = vector.shape_cast %2 : vector<1x8x32xbf16> to vector<8x32xbf16>
    %c0_5 = arith.constant 0 : index
    %c0_6 = arith.constant 0 : index
    %c0_7 = arith.constant 0 : index
    %4 = vector.load %arg4[%c0_5, %c0_6, %c0_7] : memref<1x8x32xbf16, #tpu.memory_space<vmem>>, vector<1x8x32xbf16>
    %5 = vector.shape_cast %4 : vector<1x8x32xbf16> to vector<8x32xbf16>
    %cst = arith.constant 0.000000e+00 : f32
    %6 = vector.broadcast %cst : f32 to vector<8x128xf32>
    %c0_8 = arith.constant 0 : index
    %c0_9 = arith.constant 0 : index
    %c0_10 = arith.constant 0 : index
    %7 = vector.load %arg5[%c0_8, %c0_9, %c0_10] : memref<4x32x8xbf16, #tpu.memory_space<vmem>>, vector<1x32x8xbf16>
    %8 = vector.shape_cast %7 : vector<1x32x8xbf16> to vector<32x8xbf16>
    %c0_11 = arith.constant 0 : index
    %c0_12 = arith.constant 0 : index
    %c0_13 = arith.constant 0 : index
    %9 = vector.load %arg6[%c0_11, %c0_12, %c0_13] : memref<4x32x8xbf16, #tpu.memory_space<vmem>>, vector<1x32x8xbf16>
    %10 = vector.shape_cast %9 : vector<1x32x8xbf16> to vector<32x8xbf16>
    %c0_14 = arith.constant 0 : index
    %c0_15 = arith.constant 0 : index
    %c0_16 = arith.constant 0 : index
    %11 = vector.load %arg7[%c0_14, %c0_15, %c0_16] : memref<4x32x8xbf16, #tpu.memory_space<vmem>>, vector<1x32x8xbf16>
    %12 = vector.shape_cast %11 : vector<1x32x8xbf16> to vector<32x8xbf16>
    %c0_17 = arith.constant 0 : index
    %c0_18 = arith.constant 0 : index
    %c0_19 = arith.constant 0 : index
    %13 = vector.load %arg8[%c0_17, %c0_18, %c0_19] : memref<4x8x128xbf16, #tpu.memory_space<vmem>>, vector<1x8x128xbf16>
    %14 = vector.shape_cast %13 : vector<1x8x128xbf16> to vector<8x128xbf16>
    %cst_20 = arith.constant dense<0.000000e+00> : vector<8x8xf32>
    %15 = tpu.matmul %1, %8, %cst_20 {dimension_numbers = #tpu.dot_dimension_numbers<[1], [0], [0], [1], [0, 0, 1, 1], [], []>} : vector<8x32xbf16>, vector<32x8xbf16>, vector<8x8xf32> -> vector<8x8xf32>
    %16 = arith.truncf %15 : vector<8x8xf32> to vector<8x8xbf16>
    %cst_21 = arith.constant dense<0.000000e+00> : vector<8x8xf32>
    %17 = tpu.matmul %3, %10, %cst_21 {dimension_numbers = #tpu.dot_dimension_numbers<[1], [0], [0], [1], [0, 0, 1, 1], [], []>} : vector<8x32xbf16>, vector<32x8xbf16>, vector<8x8xf32> -> vector<8x8xf32>
    %18 = arith.truncf %17 : vector<8x8xf32> to vector<8x8xbf16>
    %cst_22 = arith.constant dense<0.000000e+00> : vector<8x8xf32>
    %19 = tpu.matmul %5, %12, %cst_22 {dimension_numbers = #tpu.dot_dimension_numbers<[1], [0], [0], [1], [0, 0, 1, 1], [], []>} : vector<8x32xbf16>, vector<32x8xbf16>, vector<8x8xf32> -> vector<8x8xf32>
    %20 = arith.truncf %19 : vector<8x8xf32> to vector<8x8xbf16>
    %cst_23 = arith.constant dense<0.000000e+00> : vector<8x8xf32>
    %21 = tpu.matmul %16, %18, %cst_23 {dimension_numbers = #tpu.dot_dimension_numbers<[1], [1], [0], [0], [0, 0, 1, 0], [], []>} : vector<8x8xbf16>, vector<8x8xbf16>, vector<8x8xf32> -> vector<8x8xf32>
    %cst_24 = arith.constant dense<0xFF800000> : vector<8xf32>
    %22 = vector.multi_reduction <maximumf>, %21, %cst_24 [1] : vector<8x8xf32> to vector<8xf32>
    %23 = vector.shape_cast %22 : vector<8xf32> to vector<8x1xf32>
    %24 = vector.broadcast %23 : vector<8x1xf32> to vector<8x8xf32>
    %25 = arith.subf %21, %24 : vector<8x8xf32>
    %26 = math.exp %25 : vector<8x8xf32>
    %cst_25 = arith.constant dense<0.000000e+00> : vector<8xf32>
    %27 = vector.multi_reduction <add>, %26, %cst_25 [1] : vector<8x8xf32> to vector<8xf32>
    %28 = vector.shape_cast %27 : vector<8xf32> to vector<8x1xf32>
    %29 = arith.truncf %26 : vector<8x8xf32> to vector<8x8xbf16>
    %cst_26 = arith.constant dense<0.000000e+00> : vector<8x8xf32>
    %30 = tpu.matmul %29, %20, %cst_26 {dimension_numbers = #tpu.dot_dimension_numbers<[1], [0], [0], [1], [0, 0, 1, 1], [], []>} : vector<8x8xbf16>, vector<8x8xbf16>, vector<8x8xf32> -> vector<8x8xf32>
    %31 = tpu.reciprocal %28 {approx = true} : vector<8x1xf32> -> vector<8x1xf32>
    %32 = vector.broadcast %31 : vector<8x1xf32> to vector<8x8xf32>
    %33 = arith.mulf %30, %32 : vector<8x8xf32>
    %34 = arith.truncf %33 : vector<8x8xf32> to vector<8x8xbf16>
    %cst_27 = arith.constant dense<0.000000e+00> : vector<8x128xf32>
    %35 = tpu.matmul %34, %14, %cst_27 {dimension_numbers = #tpu.dot_dimension_numbers<[1], [0], [0], [1], [0, 0, 1, 1], [], []>} : vector<8x8xbf16>, vector<8x128xbf16>, vector<8x128xf32> -> vector<8x128xf32>
    %36 = arith.addf %6, %35 : vector<8x128xf32>
    %c1 = arith.constant 1 : index
    %c0_28 = arith.constant 0 : index
    %c0_29 = arith.constant 0 : index
    %37 = vector.load %arg5[%c1, %c0_28, %c0_29] : memref<4x32x8xbf16, #tpu.memory_space<vmem>>, vector<1x32x8xbf16>
    %38 = vector.shape_cast %37 : vector<1x32x8xbf16> to vector<32x8xbf16>
    %c1_30 = arith.constant 1 : index
    %c0_31 = arith.constant 0 : index
    %c0_32 = arith.constant 0 : index
    %39 = vector.load %arg6[%c1_30, %c0_31, %c0_32] : memref<4x32x8xbf16, #tpu.memory_space<vmem>>, vector<1x32x8xbf16>
    %40 = vector.shape_cast %39 : vector<1x32x8xbf16> to vector<32x8xbf16>
    %c1_33 = arith.constant 1 : index
    %c0_34 = arith.constant 0 : index
    %c0_35 = arith.constant 0 : index
    %41 = vector.load %arg7[%c1_33, %c0_34, %c0_35] : memref<4x32x8xbf16, #tpu.memory_space<vmem>>, vector<1x32x8xbf16>
    %42 = vector.shape_cast %41 : vector<1x32x8xbf16> to vector<32x8xbf16>
    %c1_36 = arith.constant 1 : index
    %c0_37 = arith.constant 0 : index
    %c0_38 = arith.constant 0 : index
    %43 = vector.load %arg8[%c1_36, %c0_37, %c0_38] : memref<4x8x128xbf16, #tpu.memory_space<vmem>>, vector<1x8x128xbf16>
    %44 = vector.shape_cast %43 : vector<1x8x128xbf16> to vector<8x128xbf16>
    %cst_39 = arith.constant dense<0.000000e+00> : vector<8x8xf32>
    %45 = tpu.matmul %1, %38, %cst_39 {dimension_numbers = #tpu.dot_dimension_numbers<[1], [0], [0], [1], [0, 0, 1, 1], [], []>} : vector<8x32xbf16>, vector<32x8xbf16>, vector<8x8xf32> -> vector<8x8xf32>
    %46 = arith.truncf %45 : vector<8x8xf32> to vector<8x8xbf16>
    %cst_40 = arith.constant dense<0.000000e+00> : vector<8x8xf32>
    %47 = tpu.matmul %3, %40, %cst_40 {dimension_numbers = #tpu.dot_dimension_numbers<[1], [0], [0], [1], [0, 0, 1, 1], [], []>} : vector<8x32xbf16>, vector<32x8xbf16>, vector<8x8xf32> -> vector<8x8xf32>
    %48 = arith.truncf %47 : vector<8x8xf32> to vector<8x8xbf16>
    %cst_41 = arith.constant dense<0.000000e+00> : vector<8x8xf32>
    %49 = tpu.matmul %5, %42, %cst_41 {dimension_numbers = #tpu.dot_dimension_numbers<[1], [0], [0], [1], [0, 0, 1, 1], [], []>} : vector<8x32xbf16>, vector<32x8xbf16>, vector<8x8xf32> -> vector<8x8xf32>
    %50 = arith.truncf %49 : vector<8x8xf32> to vector<8x8xbf16>
    %cst_42 = arith.constant dense<0.000000e+00> : vector<8x8xf32>
    %51 = tpu.matmul %46, %48, %cst_42 {dimension_numbers = #tpu.dot_dimension_numbers<[1], [1], [0], [0], [0, 0, 1, 0], [], []>} : vector<8x8xbf16>, vector<8x8xbf16>, vector<8x8xf32> -> vector<8x8xf32>
    %cst_43 = arith.constant dense<0xFF800000> : vector<8xf32>
    %52 = vector.multi_reduction <maximumf>, %51, %cst_43 [1] : vector<8x8xf32> to vector<8xf32>
    %53 = vector.shape_cast %52 : vector<8xf32> to vector<8x1xf32>
    %54 = vector.broadcast %53 : vector<8x1xf32> to vector<8x8xf32>
    %55 = arith.subf %51, %54 : vector<8x8xf32>
    %56 = math.exp %55 : vector<8x8xf32>
    %cst_44 = arith.constant dense<0.000000e+00> : vector<8xf32>
    %57 = vector.multi_reduction <add>, %56, %cst_44 [1] : vector<8x8xf32> to vector<8xf32>
    %58 = vector.shape_cast %57 : vector<8xf32> to vector<8x1xf32>
    %59 = arith.truncf %56 : vector<8x8xf32> to vector<8x8xbf16>
    %cst_45 = arith.constant dense<0.000000e+00> : vector<8x8xf32>
    %60 = tpu.matmul %59, %50, %cst_45 {dimension_numbers = #tpu.dot_dimension_numbers<[1], [0], [0], [1], [0, 0, 1, 1], [], []>} : vector<8x8xbf16>, vector<8x8xbf16>, vector<8x8xf32> -> vector<8x8xf32>
    %61 = tpu.reciprocal %58 {approx = true} : vector<8x1xf32> -> vector<8x1xf32>
    %62 = vector.broadcast %61 : vector<8x1xf32> to vector<8x8xf32>
    %63 = arith.mulf %60, %62 : vector<8x8xf32>
    %64 = arith.truncf %63 : vector<8x8xf32> to vector<8x8xbf16>
    %cst_46 = arith.constant dense<0.000000e+00> : vector<8x128xf32>
    %65 = tpu.matmul %64, %44, %cst_46 {dimension_numbers = #tpu.dot_dimension_numbers<[1], [0], [0], [1], [0, 0, 1, 1], [], []>} : vector<8x8xbf16>, vector<8x128xbf16>, vector<8x128xf32> -> vector<8x128xf32>
    %66 = arith.addf %36, %65 : vector<8x128xf32>
    %c2 = arith.constant 2 : index
    %c0_47 = arith.constant 0 : index
    %c0_48 = arith.constant 0 : index
    %67 = vector.load %arg5[%c2, %c0_47, %c0_48] : memref<4x32x8xbf16, #tpu.memory_space<vmem>>, vector<1x32x8xbf16>
    %68 = vector.shape_cast %67 : vector<1x32x8xbf16> to vector<32x8xbf16>
    %c2_49 = arith.constant 2 : index
    %c0_50 = arith.constant 0 : index
    %c0_51 = arith.constant 0 : index
    %69 = vector.load %arg6[%c2_49, %c0_50, %c0_51] : memref<4x32x8xbf16, #tpu.memory_space<vmem>>, vector<1x32x8xbf16>
    %70 = vector.shape_cast %69 : vector<1x32x8xbf16> to vector<32x8xbf16>
    %c2_52 = arith.constant 2 : index
    %c0_53 = arith.constant 0 : index
    %c0_54 = arith.constant 0 : index
    %71 = vector.load %arg7[%c2_52, %c0_53, %c0_54] : memref<4x32x8xbf16, #tpu.memory_space<vmem>>, vector<1x32x8xbf16>
    %72 = vector.shape_cast %71 : vector<1x32x8xbf16> to vector<32x8xbf16>
    %c2_55 = arith.constant 2 : index
    %c0_56 = arith.constant 0 : index
    %c0_57 = arith.constant 0 : index
    %73 = vector.load %arg8[%c2_55, %c0_56, %c0_57] : memref<4x8x128xbf16, #tpu.memory_space<vmem>>, vector<1x8x128xbf16>
    %74 = vector.shape_cast %73 : vector<1x8x128xbf16> to vector<8x128xbf16>
    %cst_58 = arith.constant dense<0.000000e+00> : vector<8x8xf32>
    %75 = tpu.matmul %1, %68, %cst_58 {dimension_numbers = #tpu.dot_dimension_numbers<[1], [0], [0], [1], [0, 0, 1, 1], [], []>} : vector<8x32xbf16>, vector<32x8xbf16>, vector<8x8xf32> -> vector<8x8xf32>
    %76 = arith.truncf %75 : vector<8x8xf32> to vector<8x8xbf16>
    %cst_59 = arith.constant dense<0.000000e+00> : vector<8x8xf32>
    %77 = tpu.matmul %3, %70, %cst_59 {dimension_numbers = #tpu.dot_dimension_numbers<[1], [0], [0], [1], [0, 0, 1, 1], [], []>} : vector<8x32xbf16>, vector<32x8xbf16>, vector<8x8xf32> -> vector<8x8xf32>
    %78 = arith.truncf %77 : vector<8x8xf32> to vector<8x8xbf16>
    %cst_60 = arith.constant dense<0.000000e+00> : vector<8x8xf32>
    %79 = tpu.matmul %5, %72, %cst_60 {dimension_numbers = #tpu.dot_dimension_numbers<[1], [0], [0], [1], [0, 0, 1, 1], [], []>} : vector<8x32xbf16>, vector<32x8xbf16>, vector<8x8xf32> -> vector<8x8xf32>
    %80 = arith.truncf %79 : vector<8x8xf32> to vector<8x8xbf16>
    %cst_61 = arith.constant dense<0.000000e+00> : vector<8x8xf32>
    %81 = tpu.matmul %76, %78, %cst_61 {dimension_numbers = #tpu.dot_dimension_numbers<[1], [1], [0], [0], [0, 0, 1, 0], [], []>} : vector<8x8xbf16>, vector<8x8xbf16>, vector<8x8xf32> -> vector<8x8xf32>
    %cst_62 = arith.constant dense<0xFF800000> : vector<8xf32>
    %82 = vector.multi_reduction <maximumf>, %81, %cst_62 [1] : vector<8x8xf32> to vector<8xf32>
    %83 = vector.shape_cast %82 : vector<8xf32> to vector<8x1xf32>
    %84 = vector.broadcast %83 : vector<8x1xf32> to vector<8x8xf32>
    %85 = arith.subf %81, %84 : vector<8x8xf32>
    %86 = math.exp %85 : vector<8x8xf32>
    %cst_63 = arith.constant dense<0.000000e+00> : vector<8xf32>
    %87 = vector.multi_reduction <add>, %86, %cst_63 [1] : vector<8x8xf32> to vector<8xf32>
    %88 = vector.shape_cast %87 : vector<8xf32> to vector<8x1xf32>
    %89 = arith.truncf %86 : vector<8x8xf32> to vector<8x8xbf16>
    %cst_64 = arith.constant dense<0.000000e+00> : vector<8x8xf32>
    %90 = tpu.matmul %89, %80, %cst_64 {dimension_numbers = #tpu.dot_dimension_numbers<[1], [0], [0], [1], [0, 0, 1, 1], [], []>} : vector<8x8xbf16>, vector<8x8xbf16>, vector<8x8xf32> -> vector<8x8xf32>
    %91 = tpu.reciprocal %88 {approx = true} : vector<8x1xf32> -> vector<8x1xf32>
    %92 = vector.broadcast %91 : vector<8x1xf32> to vector<8x8xf32>
    %93 = arith.mulf %90, %92 : vector<8x8xf32>
    %94 = arith.truncf %93 : vector<8x8xf32> to vector<8x8xbf16>
    %cst_65 = arith.constant dense<0.000000e+00> : vector<8x128xf32>
    %95 = tpu.matmul %94, %74, %cst_65 {dimension_numbers = #tpu.dot_dimension_numbers<[1], [0], [0], [1], [0, 0, 1, 1], [], []>} : vector<8x8xbf16>, vector<8x128xbf16>, vector<8x128xf32> -> vector<8x128xf32>
    %96 = arith.addf %66, %95 : vector<8x128xf32>
    %c3 = arith.constant 3 : index
    %c0_66 = arith.constant 0 : index
    %c0_67 = arith.constant 0 : index
    %97 = vector.load %arg5[%c3, %c0_66, %c0_67] : memref<4x32x8xbf16, #tpu.memory_space<vmem>>, vector<1x32x8xbf16>
    %98 = vector.shape_cast %97 : vector<1x32x8xbf16> to vector<32x8xbf16>
    %c3_68 = arith.constant 3 : index
    %c0_69 = arith.constant 0 : index
    %c0_70 = arith.constant 0 : index
    %99 = vector.load %arg6[%c3_68, %c0_69, %c0_70] : memref<4x32x8xbf16, #tpu.memory_space<vmem>>, vector<1x32x8xbf16>
    %100 = vector.shape_cast %99 : vector<1x32x8xbf16> to vector<32x8xbf16>
    %c3_71 = arith.constant 3 : index
    %c0_72 = arith.constant 0 : index
    %c0_73 = arith.constant 0 : index
    %101 = vector.load %arg7[%c3_71, %c0_72, %c0_73] : memref<4x32x8xbf16, #tpu.memory_space<vmem>>, vector<1x32x8xbf16>
    %102 = vector.shape_cast %101 : vector<1x32x8xbf16> to vector<32x8xbf16>
    %c3_74 = arith.constant 3 : index
    %c0_75 = arith.constant 0 : index
    %c0_76 = arith.constant 0 : index
    %103 = vector.load %arg8[%c3_74, %c0_75, %c0_76] : memref<4x8x128xbf16, #tpu.memory_space<vmem>>, vector<1x8x128xbf16>
    %104 = vector.shape_cast %103 : vector<1x8x128xbf16> to vector<8x128xbf16>
    %cst_77 = arith.constant dense<0.000000e+00> : vector<8x8xf32>
    %105 = tpu.matmul %1, %98, %cst_77 {dimension_numbers = #tpu.dot_dimension_numbers<[1], [0], [0], [1], [0, 0, 1, 1], [], []>} : vector<8x32xbf16>, vector<32x8xbf16>, vector<8x8xf32> -> vector<8x8xf32>
    %106 = arith.truncf %105 : vector<8x8xf32> to vector<8x8xbf16>
    %cst_78 = arith.constant dense<0.000000e+00> : vector<8x8xf32>
    %107 = tpu.matmul %3, %100, %cst_78 {dimension_numbers = #tpu.dot_dimension_numbers<[1], [0], [0], [1], [0, 0, 1, 1], [], []>} : vector<8x32xbf16>, vector<32x8xbf16>, vector<8x8xf32> -> vector<8x8xf32>
    %108 = arith.truncf %107 : vector<8x8xf32> to vector<8x8xbf16>
    %cst_79 = arith.constant dense<0.000000e+00> : vector<8x8xf32>
    %109 = tpu.matmul %5, %102, %cst_79 {dimension_numbers = #tpu.dot_dimension_numbers<[1], [0], [0], [1], [0, 0, 1, 1], [], []>} : vector<8x32xbf16>, vector<32x8xbf16>, vector<8x8xf32> -> vector<8x8xf32>
    %110 = arith.truncf %109 : vector<8x8xf32> to vector<8x8xbf16>
    %cst_80 = arith.constant dense<0.000000e+00> : vector<8x8xf32>
    %111 = tpu.matmul %106, %108, %cst_80 {dimension_numbers = #tpu.dot_dimension_numbers<[1], [1], [0], [0], [0, 0, 1, 0], [], []>} : vector<8x8xbf16>, vector<8x8xbf16>, vector<8x8xf32> -> vector<8x8xf32>
    %cst_81 = arith.constant dense<0xFF800000> : vector<8xf32>
    %112 = vector.multi_reduction <maximumf>, %111, %cst_81 [1] : vector<8x8xf32> to vector<8xf32>
    %113 = vector.shape_cast %112 : vector<8xf32> to vector<8x1xf32>
    %114 = vector.broadcast %113 : vector<8x1xf32> to vector<8x8xf32>
    %115 = arith.subf %111, %114 : vector<8x8xf32>
    %116 = math.exp %115 : vector<8x8xf32>
    %cst_82 = arith.constant dense<0.000000e+00> : vector<8xf32>
    %117 = vector.multi_reduction <add>, %116, %cst_82 [1] : vector<8x8xf32> to vector<8xf32>
    %118 = vector.shape_cast %117 : vector<8xf32> to vector<8x1xf32>
    %119 = arith.truncf %116 : vector<8x8xf32> to vector<8x8xbf16>
    %cst_83 = arith.constant dense<0.000000e+00> : vector<8x8xf32>
    %120 = tpu.matmul %119, %110, %cst_83 {dimension_numbers = #tpu.dot_dimension_numbers<[1], [0], [0], [1], [0, 0, 1, 1], [], []>} : vector<8x8xbf16>, vector<8x8xbf16>, vector<8x8xf32> -> vector<8x8xf32>
    %121 = tpu.reciprocal %118 {approx = true} : vector<8x1xf32> -> vector<8x1xf32>
    %122 = vector.broadcast %121 : vector<8x1xf32> to vector<8x8xf32>
    %123 = arith.mulf %120, %122 : vector<8x8xf32>
    %124 = arith.truncf %123 : vector<8x8xf32> to vector<8x8xbf16>
    %cst_84 = arith.constant dense<0.000000e+00> : vector<8x128xf32>
    %125 = tpu.matmul %124, %104, %cst_84 {dimension_numbers = #tpu.dot_dimension_numbers<[1], [0], [0], [1], [0, 0, 1, 1], [], []>} : vector<8x8xbf16>, vector<8x128xbf16>, vector<8x128xf32> -> vector<8x128xf32>
    %126 = arith.addf %96, %125 : vector<8x128xf32>
    %c0_85 = arith.constant 0 : index
    %c0_86 = arith.constant 0 : index
    %127 = vector.load %arg9[%c0_85, %c0_86] : memref<1x128xf32, #tpu.memory_space<vmem>>, vector<1x128xf32>
    %128 = vector.broadcast %127 : vector<1x128xf32> to vector<8x128xf32>
    %129 = arith.addf %126, %128 : vector<8x128xf32>
    %c0_87 = arith.constant 0 : index
    %c0_88 = arith.constant 0 : index
    %c0_89 = arith.constant 0 : index
    %130 = vector.load %arg10[%c0_87, %c0_88, %c0_89] : memref<1x8x128xf32, #tpu.memory_space<vmem>>, vector<1x8x128xf32>
    %131 = vector.shape_cast %130 : vector<1x8x128xf32> to vector<8x128xf32>
    %132 = vector.shape_cast %129 : vector<8x128xf32> to vector<1x8x128xf32>
    tpu.vector_store %arg10[%c0_87, %c0_88, %c0_89], %132 {strides = array<i32>} : memref<1x8x128xf32, #tpu.memory_space<vmem>>, vector<1x8x128xf32>,
    return
  }
  func.func @transform_0(%arg0: i32, %arg1: i32) -> (i32, i32, i32) {
    %c0_i32 = arith.constant 0 : i32
    %c0_i32_0 = arith.constant 0 : i32
    return %arg0, %arg1, %c0_i32 : i32, i32, i32
  }
  func.func @transform_1(%arg0: i32, %arg1: i32) -> (i32, i32, i32) {
    %c0_i32 = arith.constant 0 : i32
    %c0_i32_0 = arith.constant 0 : i32
    %c0_i32_1 = arith.constant 0 : i32
    return %arg0, %c0_i32, %c0_i32_0 : i32, i32, i32
  }
  func.func @transform_2(%arg0: i32, %arg1: i32) -> (i32, i32, i32) {
    %c0_i32 = arith.constant 0 : i32
    %c0_i32_0 = arith.constant 0 : i32
    %c0_i32_1 = arith.constant 0 : i32
    return %arg0, %c0_i32, %c0_i32_0 : i32, i32, i32
  }
  func.func @transform_3(%arg0: i32, %arg1: i32) -> (i32, i32, i32) {
    %c0_i32 = arith.constant 0 : i32
    %c0_i32_0 = arith.constant 0 : i32
    %c0_i32_1 = arith.constant 0 : i32
    %c0_i32_2 = arith.constant 0 : i32
    return %c0_i32, %c0_i32_0, %c0_i32_1 : i32, i32, i32
  }
  func.func @transform_4(%arg0: i32, %arg1: i32) -> (i32, i32, i32) {
    %c0_i32 = arith.constant 0 : i32
    %c0_i32_0 = arith.constant 0 : i32
    %c0_i32_1 = arith.constant 0 : i32
    %c0_i32_2 = arith.constant 0 : i32
    return %c0_i32, %c0_i32_0, %c0_i32_1 : i32, i32, i32
  }
  func.func @transform_5(%arg0: i32, %arg1: i32) -> (i32, i32, i32) {
    %c0_i32 = arith.constant 0 : i32
    %c0_i32_0 = arith.constant 0 : i32
    %c0_i32_1 = arith.constant 0 : i32
    %c0_i32_2 = arith.constant 0 : i32
    return %c0_i32, %c0_i32_0, %c0_i32_1 : i32, i32, i32
  }
  func.func @transform_6(%arg0: i32, %arg1: i32) -> (i32, i32, i32) {
    %c0_i32 = arith.constant 0 : i32
    %c0_i32_0 = arith.constant 0 : i32
    %c0_i32_1 = arith.constant 0 : i32
    %c0_i32_2 = arith.constant 0 : i32
    return %c0_i32, %c0_i32_0, %c0_i32_1 : i32, i32, i32
  }
  func.func @transform_7(%arg0: i32, %arg1: i32) -> (i32, i32) {
    %c0_i32 = arith.constant 0 : i32
    %c0_i32_0 = arith.constant 0 : i32
    %c0_i32_1 = arith.constant 0 : i32
    return %c0_i32, %c0_i32_0 : i32, i32
  }
  func.func @transform_8(%arg0: i32, %arg1: i32) -> (i32, i32, i32) {
    %c0_i32 = arith.constant 0 : i32
    %c0_i32_0 = arith.constant 0 : i32
    return %arg0, %arg1, %c0_i32 : i32, i32, i32
  }
}

</mosaic_0001>

<llo_original>
// kernel: tpu_custom_call.1
$region0: #{tpu_custom_call.1}
  #allocation0 [shape = 'u32[]', space=smem, size = 0x4, offset = 0x4, fixed_abs, tag = 'smem constant byte address 0x4 - core index']
  #allocation1 [shape = 'u32[72,128]{1,0:T(1,128)}', space=vmem, size = 0x9000, scoped, tag = 'internal scratch']
  %s0 = inlined_call_operand.vmem [shape: bf16[2,8,32], index: 0, kind: input, shape index: {}]
  %s1 = inlined_call_operand.vmem [shape: bf16[2,8,32], index: 1, kind: input, shape index: {}]
  %s2 = inlined_call_operand.vmem [shape: bf16[2,8,32], index: 2, kind: input, shape index: {}]
  %s3 = inlined_call_operand.vmem [shape: bf16[4,32,8], index: 3, kind: input, shape index: {}]
  %s4 = inlined_call_operand.vmem [shape: bf16[4,32,8], index: 4, kind: input, shape index: {}]
  %s5 = inlined_call_operand.vmem [shape: bf16[4,32,8], index: 5, kind: input, shape index: {}]
  %s6 = inlined_call_operand.vmem [shape: bf16[4,8,128], index: 6, kind: input, shape index: {}]
  %s7 = inlined_call_operand.vmem [shape: f32[1,128], index: 7, kind: input, shape index: {}]
  %s8 = inlined_call_operand.hbm [shape: f32[2,8,128], index: 8, kind: output, shape index: {}]
  %s9 = sld [smem:[#allocation0]]
  $region65: #{tpu_custom_call.1} parent=0
    _
  %s11 = ssub.s32 1, %s9
  %s12 = scalar_select 0, %s11, %s9
  $region1: #{tpu_custom_call.1} parent=0
    #allocation2 [shape = 'u8[8192]{0}', space=vmem, size = 0x2000, scoped, tag = 'output window, operand 0']
    #allocation3 [shape = 's32[2]{0}', space=sflag, size = 0x8, scoped, tag = 'scoped memory for tpu_custom_call.1']
    %13 = vsyncpa [#allocation3], 0
    %s14 = scalar_lea.sflag [#allocation3], 1
    %15 = vsyncpa %s14, 0
    loop: start=0, step=1, limit=4
    $region2: #{tpu_custom_call.1} parent=1 // loop_pre_header
      _
    $region3: #{tpu_custom_call.1} parent=1 // loop_header
      %s17 = sphi 0, %s21
      %p18 = scmp.ge.s32.totalorder %s17, 4
      %s24 = sphi 0, %s36
      %s25 = sphi 0, %s32
      %s26 = sphi 0, %s24
      %s27 = sphi 0, %s25
      %s28 = sphi 0, %s26
      %s29 = sphi 0, %s27
      %s41 = sphi 0, %s43
      %s44 = sphi 0, %s41
      %s45 = sphi 0, %s44
      %s61 = sphi 0, %s45
      %s67 = sphi 0, %s69
      %s70 = sphi 0, %s67
      %s71 = sphi 0, %s70
      %s87 = sphi 0, %s71
      %s93 = sphi 0, %s95
      %s96 = sphi 0, %s93
      %s97 = sphi 0, %s96
      %s113 = sphi 0, %s97
      %s117 = sphi 0, %s117
      %s119 = sphi 0, %s117
      %s120 = sphi 0, %s119
      %s134 = sphi 0, %s120
      %s138 = sphi 0, %s138
      %s140 = sphi 0, %s138
      %s141 = sphi 0, %s140
      %s155 = sphi 0, %s141
      %s159 = sphi 0, %s159
      %s161 = sphi 0, %s159
      %s162 = sphi 0, %s161
      %s176 = sphi 0, %s162
      %s180 = sphi 0, %s180
      %s182 = sphi 0, %s180
      %s183 = sphi 0, %s182
      %s197 = sphi 0, %s183
      %s201 = sphi 0, %s201
      %s203 = sphi 0, %s201
      %s204 = sphi 0, %s203
      %s218 = sphi 0, %s204
      %s226 = sphi 0, %s228
      %s229 = sphi 0, %s226
      %s230 = sphi 0, %s229
      %s246 = sphi 0, %s230
    $region4: #{tpu_custom_call.1} parent=1 // loop_header_branch
      %20 = sbr.rel (%p18) target = $region8
    $region5: #{tpu_custom_call.1} parent=1 // loop_body
      %s22 = ssub.s32 %s17, 1
      %s23 = ssub.s32 %s17, 2
      %s30 = sadd.s32 1, %s25
      %p31 = scmp.ge.s32.totalorder %s30, 1
      %s32 = scalar_select %p31, 0, %s30
      %s33 = sadd.s32 1, %s24
      %s34 = scalar_select %p31, %s33, %s24
      %p35 = scmp.ge.s32.totalorder %s34, 2
      %s36 = scalar_select %p35, 0, %s34
      %s37 = ssub.s32 %s24, %s36
      %s38 = ssub.s32 %s25, %s32
      %s39 = sor.u32 %s37, %s38
      %p40 = scmp.eq.s32.totalorder %s39, 0
      %s42 = sadd.s32 %s41, 1
      %s43 = scalar_select %p40, %s41, %s42
      %p46 = pneg %p40
      %p47 = scmp.eq.s32.totalorder %s17, 1
      %p48 = por %p46, %p47
      %p49 = scmp.ne.s32.totalorder %s41, %s44
      %p50 = scmp.eq.s32.totalorder %s17, 0
      %p51 = por %p49, %p50
      %p52 = scmp.ne.s32.totalorder %s41, %s44
      %p53 = scmp.eq.s32.totalorder %s22, 1
      %p54 = por %p52, %p53
      %p55 = scmp.ne.s32.totalorder %s44, %s45
      %p56 = scmp.eq.s32.totalorder %s22, 0
      %p57 = por %p55, %p56
      %p58 = scmp.ne.s32.totalorder %s44, %s45
      %p59 = scmp.eq.s32.totalorder %s23, 1
      %p60 = por %p58, %p59
      %p62 = scmp.ne.s32.totalorder %s45, %s61
      %p63 = scmp.eq.s32.totalorder %s23, 0
      %p64 = por %p62, %p63
      %s65 = ssub.s32 %s24, %s36
      %p66 = scmp.eq.s32.totalorder %s65, 0
      %s68 = sadd.s32 %s67, 1
      %s69 = scalar_select %p66, %s67, %s68
      %p72 = pneg %p66
      %p73 = scmp.eq.s32.totalorder %s17, 1
      %p74 = por %p72, %p73
      %p75 = scmp.ne.s32.totalorder %s67, %s70
      %p76 = scmp.eq.s32.totalorder %s17, 0
      %p77 = por %p75, %p76
      %p78 = scmp.ne.s32.totalorder %s67, %s70
      %p79 = scmp.eq.s32.totalorder %s22, 1
      %p80 = por %p78, %p79
      %p81 = scmp.ne.s32.totalorder %s70, %s71
      %p82 = scmp.eq.s32.totalorder %s22, 0
      %p83 = por %p81, %p82
      %p84 = scmp.ne.s32.totalorder %s70, %s71
      %p85 = scmp.eq.s32.totalorder %s23, 1
      %p86 = por %p84, %p85
      %p88 = scmp.ne.s32.totalorder %s71, %s87
      %p89 = scmp.eq.s32.totalorder %s23, 0
      %p90 = por %p88, %p89
      %s91 = ssub.s32 %s24, %s36
      %p92 = scmp.eq.s32.totalorder %s91, 0
      %s94 = sadd.s32 %s93, 1
      %s95 = scalar_select %p92, %s93, %s94
      %p98 = pneg %p92
      %p99 = scmp.eq.s32.totalorder %s17, 1
      %p100 = por %p98, %p99
      %p101 = scmp.ne.s32.totalorder %s93, %s96
      %p102 = scmp.eq.s32.totalorder %s17, 0
      %p103 = por %p101, %p102
      %p104 = scmp.ne.s32.totalorder %s93, %s96
      %p105 = scmp.eq.s32.totalorder %s22, 1
      %p106 = por %p104, %p105
      %p107 = scmp.ne.s32.totalorder %s96, %s97
      %p108 = scmp.eq.s32.totalorder %s22, 0
      %p109 = por %p107, %p108
      %p110 = scmp.ne.s32.totalorder %s96, %s97
      %p111 = scmp.eq.s32.totalorder %s23, 1
      %p112 = por %p110, %p111
      %p114 = scmp.ne.s32.totalorder %s97, %s113
      %p115 = scmp.eq.s32.totalorder %s23, 0
      %p116 = por %p114, %p115
      %s118 = sadd.s32 %s117, 1
      %p121 = scmp.eq.s32.totalorder %s17, 1
      %p122 = scmp.ne.s32.totalorder %s117, %s119
      %p123 = scmp.eq.s32.totalorder %s17, 0
      %p124 = por %p122, %p123
      %p125 = scmp.ne.s32.totalorder %s117, %s119
      %p126 = scmp.eq.s32.totalorder %s22, 1
      %p127 = por %p125, %p126
      %p128 = scmp.ne.s32.totalorder %s119, %s120
      %p129 = scmp.eq.s32.totalorder %s22, 0
      %p130 = por %p128, %p129
      %p131 = scmp.ne.s32.totalorder %s119, %s120
      %p132 = scmp.eq.s32.totalorder %s23, 1
      %p133 = por %p131, %p132
      %p135 = scmp.ne.s32.totalorder %s120, %s134
      %p136 = scmp.eq.s32.totalorder %s23, 0
      %p137 = por %p135, %p136
      %s139 = sadd.s32 %s138, 1
      %p142 = scmp.eq.s32.totalorder %s17, 1
      %p143 = scmp.ne.s32.totalorder %s138, %s140
      %p144 = scmp.eq.s32.totalorder %s17, 0
      %p145 = por %p143, %p144
      %p146 = scmp.ne.s32.totalorder %s138, %s140
      %p147 = scmp.eq.s32.totalorder %s22, 1
      %p148 = por %p146, %p147
      %p149 = scmp.ne.s32.totalorder %s140, %s141
      %p150 = scmp.eq.s32.totalorder %s22, 0
      %p151 = por %p149, %p150
      %p152 = scmp.ne.s32.totalorder %s140, %s141
      %p153 = scmp.eq.s32.totalorder %s23, 1
      %p154 = por %p152, %p153
      %p156 = scmp.ne.s32.totalorder %s141, %s155
      %p157 = scmp.eq.s32.totalorder %s23, 0
      %p158 = por %p156, %p157
      %s160 = sadd.s32 %s159, 1
      %p163 = scmp.eq.s32.totalorder %s17, 1
      %p164 = scmp.ne.s32.totalorder %s159, %s161
      %p165 = scmp.eq.s32.totalorder %s17, 0
      %p166 = por %p164, %p165
      %p167 = scmp.ne.s32.totalorder %s159, %s161
      %p168 = scmp.eq.s32.totalorder %s22, 1
      %p169 = por %p167, %p168
      %p170 = scmp.ne.s32.totalorder %s161, %s162
      %p171 = scmp.eq.s32.totalorder %s22, 0
      %p172 = por %p170, %p171
      %p173 = scmp.ne.s32.totalorder %s161, %s162
      %p174 = scmp.eq.s32.totalorder %s23, 1
      %p175 = por %p173, %p174
      %p177 = scmp.ne.s32.totalorder %s162, %s176
      %p178 = scmp.eq.s32.totalorder %s23, 0
      %p179 = por %p177, %p178
      %s181 = sadd.s32 %s180, 1
      %p184 = scmp.eq.s32.totalorder %s17, 1
      %p185 = scmp.ne.s32.totalorder %s180, %s182
      %p186 = scmp.eq.s32.totalorder %s17, 0
      %p187 = por %p185, %p186
      %p188 = scmp.ne.s32.totalorder %s180, %s182
      %p189 = scmp.eq.s32.totalorder %s22, 1
      %p190 = por %p188, %p189
      %p191 = scmp.ne.s32.totalorder %s182, %s183
      %p192 = scmp.eq.s32.totalorder %s22, 0
      %p193 = por %p191, %p192
      %p194 = scmp.ne.s32.totalorder %s182, %s183
      %p195 = scmp.eq.s32.totalorder %s23, 1
      %p196 = por %p194, %p195
      %p198 = scmp.ne.s32.totalorder %s183, %s197
      %p199 = scmp.eq.s32.totalorder %s23, 0
      %p200 = por %p198, %p199
      %s202 = sadd.s32 %s201, 1
      %p205 = scmp.eq.s32.totalorder %s17, 1
      %p206 = scmp.ne.s32.totalorder %s201, %s203
      %p207 = scmp.eq.s32.totalorder %s17, 0
      %p208 = por %p206, %p207
      %p209 = scmp.ne.s32.totalorder %s201, %s203
      %p210 = scmp.eq.s32.totalorder %s22, 1
      %p211 = por %p209, %p210
      %p212 = scmp.ne.s32.totalorder %s203, %s204
      %p213 = scmp.eq.s32.totalorder %s22, 0
      %p214 = por %p212, %p213
      %p215 = scmp.ne.s32.totalorder %s203, %s204
      %p216 = scmp.eq.s32.totalorder %s23, 1
      %p217 = por %p215, %p216
      %p219 = scmp.ne.s32.totalorder %s204, %s218
      %p220 = scmp.eq.s32.totalorder %s23, 0
      %p221 = por %p219, %p220
      %s222 = ssub.s32 %s24, %s36
      %s223 = ssub.s32 %s25, %s32
      %s224 = sor.u32 %s222, %s223
      %p225 = scmp.eq.s32.totalorder %s224, 0
      %s227 = sadd.s32 %s226, 1
      %s228 = scalar_select %p225, %s226, %s227
      %p231 = pneg %p225
      %p232 = scmp.eq.s32.totalorder %s17, 1
      %p233 = por %p231, %p232
      %p234 = scmp.ne.s32.totalorder %s226, %s229
      %p235 = scmp.eq.s32.totalorder %s17, 0
      %p236 = por %p234, %p235
      %p237 = scmp.ne.s32.totalorder %s226, %s229
      %p238 = scmp.eq.s32.totalorder %s22, 1
      %p239 = por %p237, %p238
      %p240 = scmp.ne.s32.totalorder %s229, %s230
      %p241 = scmp.eq.s32.totalorder %s22, 0
      %p242 = por %p240, %p241
      %p243 = scmp.ne.s32.totalorder %s229, %s230
      %p244 = scmp.eq.s32.totalorder %s23, 1
      %p245 = por %p243, %p244
      %p247 = scmp.ne.s32.totalorder %s230, %s246
      %p248 = scmp.eq.s32.totalorder %s23, 0
      %p249 = por %p247, %p248
      %p250 = scmp.le.s32.totalorder 1, %s17
      %p251 = scmp.lt.s32.totalorder %s17, 3
      %p252 = pnand %p250, %p251
      %p253 = pneg %p252
      // Predicated region
      $region9: #{tpu_custom_call.1} parent=5 // pred_check
        _
      $region10: #{tpu_custom_call.1} parent=5 // pred_check_branch
        %255 = sbr.rel (%p252) target = $region12
      $region11: #{tpu_custom_call.1} parent=5 // pred_region
        %s256 = ssub.s32 %s17, 1
        // Predicated region
        $region13: #{tpu_custom_call.1} parent=11 // pred_check
          %p257 = pneg %p130
        $region14: #{tpu_custom_call.1} parent=11 // pred_check_branch
          %259 = sbr.rel (%p257) target = $region16
        $region15: #{tpu_custom_call.1} parent=11 // pred_region
          _
        $region16: #{tpu_custom_call.1} parent=11 // pred_fallthru
          _
        // Predicated region
        $region17: #{tpu_custom_call.1} parent=11 // pred_check
          %p260 = pneg %p151
        $region18: #{tpu_custom_call.1} parent=11 // pred_check_branch
          %262 = sbr.rel (%p260) target = $region20
        $region19: #{tpu_custom_call.1} parent=11 // pred_region
          _
        $region20: #{tpu_custom_call.1} parent=11 // pred_fallthru
          _
        // Predicated region
        $region21: #{tpu_custom_call.1} parent=11 // pred_check
          %p263 = pneg %p172
        $region22: #{tpu_custom_call.1} parent=11 // pred_check_branch
          %265 = sbr.rel (%p263) target = $region24
        $region23: #{tpu_custom_call.1} parent=11 // pred_region
          _
        $region24: #{tpu_custom_call.1} parent=11 // pred_fallthru
          _
        // Predicated region
        $region25: #{tpu_custom_call.1} parent=11 // pred_check
          %p266 = pneg %p193
        $region26: #{tpu_custom_call.1} parent=11 // pred_check_branch
          %268 = sbr.rel (%p266) target = $region28
        $region27: #{tpu_custom_call.1} parent=11 // pred_region
          _
        $region28: #{tpu_custom_call.1} parent=11 // pred_fallthru
          _
        // Predicated region
        $region29: #{tpu_custom_call.1} parent=11 // pred_check
          %p269 = pneg %p214
        $region30: #{tpu_custom_call.1} parent=11 // pred_check_branch
          %271 = sbr.rel (%p269) target = $region32
        $region31: #{tpu_custom_call.1} parent=11 // pred_region
          _
        $region32: #{tpu_custom_call.1} parent=11 // pred_fallthru
          _
      $region12: #{tpu_custom_call.1} parent=5 // pred_fallthru
        _
      %p272 = scmp.lt.s32.totalorder %s17, 2
      // Predicated region
      $region33: #{tpu_custom_call.1} parent=5 // pred_check
        %p273 = pneg %p272
      $region34: #{tpu_custom_call.1} parent=5 // pred_check_branch
        %275 = sbr.rel (%p273) target = $region36
      $region35: #{tpu_custom_call.1} parent=5 // pred_region
        // Predicated region
        $region37: #{tpu_custom_call.1} parent=35 // pred_check
          %p276 = pneg %p51
        $region38: #{tpu_custom_call.1} parent=35 // pred_check_branch
          %278 = sbr.rel (%p276) target = $region40
        $region39: #{tpu_custom_call.1} parent=35 // pred_region
          %p279 = scmp.lt.s32.totalorder %s24, 1
          %s280 = scalar_select %p279, %s24, 1
          %p281 = scmp.lt.s32.totalorder %s25, 0
          %s282 = scalar_select %p281, %s25, 0
          %s283 = sadd.s32 %s282, %s280
          %s284 = smul.addr %s283, 4
          %s285 = scalar_lea.vmem %s0, %s284
        $region40: #{tpu_custom_call.1} parent=35 // pred_fallthru
          _
        // Predicated region
        $region41: #{tpu_custom_call.1} parent=35 // pred_check
          %p286 = pneg %p77
        $region42: #{tpu_custom_call.1} parent=35 // pred_check_branch
          %288 = sbr.rel (%p286) target = $region44
        $region43: #{tpu_custom_call.1} parent=35 // pred_region
          %p289 = scmp.lt.s32.totalorder %s24, 1
          %s290 = scalar_select %p289, %s24, 1
          %s291 = smul.addr %s290, 4
          %s292 = scalar_lea.vmem %s1, %s291
        $region44: #{tpu_custom_call.1} parent=35 // pred_fallthru
          _
        // Predicated region
        $region45: #{tpu_custom_call.1} parent=35 // pred_check
          %p293 = pneg %p103
        $region46: #{tpu_custom_call.1} parent=35 // pred_check_branch
          %295 = sbr.rel (%p293) target = $region48
        $region47: #{tpu_custom_call.1} parent=35 // pred_region
          %p296 = scmp.lt.s32.totalorder %s24, 1
          %s297 = scalar_select %p296, %s24, 1
          %s298 = smul.addr %s297, 4
          %s299 = scalar_lea.vmem %s2, %s298
        $region48: #{tpu_custom_call.1} parent=35 // pred_fallthru
          _
      $region36: #{tpu_custom_call.1} parent=5 // pred_fallthru
        _
      %p300 = scmp.le.s32.totalorder 1, %s17
      %p301 = scmp.lt.s32.totalorder %s17, 3
      %p302 = pnand %p300, %p301
      %p303 = pneg %p302
      // Predicated region
      $region49: #{tpu_custom_call.1} parent=5 // pred_check
        _
      $region50: #{tpu_custom_call.1} parent=5 // pred_check_branch
        %305 = sbr.rel (%p302) target = $region52
      $region51: #{tpu_custom_call.1} parent=5 // pred_region
        %s306 = ssub.s32 %s17, 1
        %p307 = scmp.lt.s32.totalorder %s26, 1
        %s308 = scalar_select %p307, %s26, 1
        %p309 = scmp.lt.s32.totalorder %s27, 0
        %s310 = scalar_select %p309, %s27, 0
        %s311 = sadd.s32 %s310, %s308
        %s312 = smul.addr %s311, 4
        %s313 = scalar_lea.vmem %s0, %s312
        %p314 = pneg %p57
        %p315 = pneg %p54
        %p316 = scmp.lt.s32.totalorder %s26, 1
        %s317 = scalar_select %p316, %s26, 1
        %s318 = smul.addr %s317, 4
        %s319 = scalar_lea.vmem %s1, %s318
        %p320 = pneg %p83
        %p321 = pneg %p80
        %p322 = scmp.lt.s32.totalorder %s26, 1
        %s323 = scalar_select %p322, %s26, 1
        %s324 = smul.addr %s323, 4
        %s325 = scalar_lea.vmem %s2, %s324
        %p326 = pneg %p109
        %p327 = pneg %p106
        %p328 = pneg %p130
        %p329 = pneg %p127
        %p330 = pneg %p151
        %p331 = pneg %p148
        %p332 = pneg %p172
        %p333 = pneg %p169
        %p334 = pneg %p193
        %p335 = pneg %p190
        %p336 = pneg %p214
        %p337 = pneg %p211
        %p338 = pneg %p242
        %p339 = pneg %p239
        %s340 = sand.u32 %s229, 1
        %s341 = scalar_lea.sflag [#allocation3], %s340
        %s342 = sand.u32 %s229, 1
        %s343 = smul.addr %s342, 8
        %s344 = scalar_lea.vmem [#allocation2], %s343
        %p345 = scmp.lt.s32.totalorder %s26, 1
        %s346 = scalar_select %p345, %s26, 1
        %p347 = scmp.lt.s32.totalorder %s27, 0
        %s348 = scalar_select %p347, %s27, 0
        %s349 = sadd.s32 %s348, %s346
        %s350 = smul.addr %s349, 4
        %s351 = scalar_lea.vmem %s0, %s350
        %p352 = scmp.lt.s32.totalorder %s26, 1
        %s353 = scalar_select %p352, %s26, 1
        %s354 = smul.addr %s353, 4
        %s355 = scalar_lea.vmem %s1, %s354
        %p356 = scmp.lt.s32.totalorder %s26, 1
        %s357 = scalar_select %p356, %s26, 1
        %s358 = smul.addr %s357, 4
        %s359 = scalar_lea.vmem %s2, %s358
        %v361 = vld [vmem:[%s351] sm:$0xf]
        %v362 = vld [vmem:[%s355] sm:$0xf]
        %v363 = vld [vmem:[%s359] sm:$0xf]
        %v364 = vld [vmem:[%s3] sm:$0xf]
        %v365 = vld [vmem:[%s3 + $0x4] sm:$0xf]
        %v366 = vld [vmem:[%s3 + $0x8] sm:$0xf]
        %v367 = vld [vmem:[%s3 + $0xc] sm:$0xf]
        %v368 = vld [vmem:[%s4] sm:$0xf]
        %v369 = vld [vmem:[%s4 + $0x4] sm:$0xf]
        %v370 = vld [vmem:[%s4 + $0x8] sm:$0xf]
        %v371 = vld [vmem:[%s4 + $0xc] sm:$0xf]
        %v372 = vld [vmem:[%s5] sm:$0xf]
        %v373 = vld [vmem:[%s5 + $0x4] sm:$0xf]
        %v374 = vld [vmem:[%s5 + $0x8] sm:$0xf]
        %v375 = vld [vmem:[%s5 + $0xc] sm:$0xf]
        %v376 = vld [vmem:[%s6] sm:$0xf]
        %v381 = vunpack.c.l.b16 %v364
        %v382 = vunpack.c.l.b16 %v365
        %v383 = vunpack.c.l.b16 %v366
        %v384 = vunpack.c.l.b16 %v367
        %v385 = vpack.c.b16 %v382, %v381
        %v386 = vpack.c.b16 %v384, %v383
        %vm389 = vcmask 261120
        %v391 = vsel %vm389, %v361, 0
        %393 = vmatpush.bf16.msra.mxu0 0
        %394 = vmatpush.bf16.msra.mxu0 0
        %395 = vmatpush.bf16.msra.mxu0 0
        %396 = vmatpush.bf16.msra.mxu0 0
        %397 = vmatpush.bf16.msra.mxu0 0
        %398 = vmatpush.bf16.msra.mxu0 0
        %399 = vmatpush.bf16.msra.mxu0 %v386
        %400 = vmatpush.bf16.msra.mxu0 %v385
        %401 = vmatmul.bf16.gmra.mxu0 %v391
        %v402 = vpop.f32.mrf.mxu0
        %v403 = vadd.f32 0.0, %v402
        %v404 = vpop.f32.mrf.mxu0
        %405 = vdwg.mxu0
        %v406 = vpack.c.bf16 %v403, %v403
        %v411 = vunpack.c.l.b16 %v368
        %v412 = vunpack.c.l.b16 %v369
        %v413 = vunpack.c.l.b16 %v370
        %v414 = vunpack.c.l.b16 %v371
        %v415 = vpack.c.b16 %v412, %v411
        %v416 = vpack.c.b16 %v414, %v413
        %v420 = vsel %vm389, %v362, 0
        %422 = vmatpush.bf16.msra.mxu0 0
        %423 = vmatpush.bf16.msra.mxu0 0
        %424 = vmatpush.bf16.msra.mxu0 0
        %425 = vmatpush.bf16.msra.mxu0 0
        %426 = vmatpush.bf16.msra.mxu0 0
        %427 = vmatpush.bf16.msra.mxu0 0
        %428 = vmatpush.bf16.msra.mxu0 %v416
        %429 = vmatpush.bf16.msra.mxu0 %v415
        %430 = vmatmul.bf16.gmra.mxu0 %v420
        %v431 = vpop.f32.mrf.mxu0
        %v432 = vadd.f32 0.0, %v431
        %v433 = vpop.f32.mrf.mxu0
        %434 = vdwg.mxu0
        %v435 = vpack.c.bf16 %v432, %v432
        %v440 = vunpack.c.l.b16 %v372
        %v441 = vunpack.c.l.b16 %v373
        %v442 = vunpack.c.l.b16 %v374
        %v443 = vunpack.c.l.b16 %v375
        %v444 = vpack.c.b16 %v441, %v440
        %v445 = vpack.c.b16 %v443, %v442
        %v449 = vsel %vm389, %v363, 0
        %451 = vmatpush.bf16.msra.mxu0 0
        %452 = vmatpush.bf16.msra.mxu0 0
        %453 = vmatpush.bf16.msra.mxu0 0
        %454 = vmatpush.bf16.msra.mxu0 0
        %455 = vmatpush.bf16.msra.mxu0 0
        %456 = vmatpush.bf16.msra.mxu0 0
        %457 = vmatpush.bf16.msra.mxu0 %v445
        %458 = vmatpush.bf16.msra.mxu0 %v444
        %459 = vmatmul.bf16.gmra.mxu0 %v449
        %v460 = vpop.f32.mrf.mxu0
        %v461 = vadd.f32 0.0, %v460
        %v462 = vpop.f32.mrf.mxu0
        %463 = vdwg.mxu0
        %v464 = vpack.c.bf16 %v461, %v461
        %vm465 = vcmask 64512
        %v467 = vsel %vm465, %v406, 0
        %v470 = vsel %vm465, %v435, 0
        %472 = vmatpush.bf16.xpose.msra.mxu0 0
        %473 = vmatpush.bf16.xpose.msra.mxu0 0
        %474 = vmatpush.bf16.xpose.msra.mxu0 0
        %475 = vmatpush.bf16.xpose.msra.mxu0 0
        %476 = vmatpush.bf16.xpose.msra.mxu0 0
        %477 = vmatpush.bf16.xpose.msra.mxu0 0
        %478 = vmatpush.bf16.xpose.msra.mxu0 0
        %479 = vmatpush.bf16.xpose.msra.mxu0 %v470
        %480 = vmatmul.bf16.gmra.mxu0 %v467
        %v481 = vpop.f32.mrf.mxu0
        %v482 = vadd.f32 0.0, %v481
        %v483 = vpop.f32.mrf.mxu0
        %484 = vdwg.mxu0
        %v485 = vsel %vm465, %v482, -inf
        %486 = vmax.xlane.f32.xlu0 %v485
        %v487 = vpop.xlane.xlu0 %486
        %v488 = vsub.f32 %v482, %v487
        %v489 = vmul.f32 %v488, 1.442695
        %v490 = vpow.pop %v489
        %v491 = vsel %vm465, %v490, 0.0
        %492 = vadd.xlane.f32.xlu0 %v491
        %v493 = vpop.xlane.xlu0 %492
        %v494 = vpack.c.bf16 %v490, %v490
        %v496 = vsel %vm465, %v494, 0
        %vm498 = vcmask 1043456
        %v500 = vsel %vm498, %v464, 0
        %502 = vmatpush.bf16.msra.mxu0 0
        %503 = vmatpush.bf16.msra.mxu0 0
        %504 = vmatpush.bf16.msra.mxu0 0
        %505 = vmatpush.bf16.msra.mxu0 0
        %506 = vmatpush.bf16.msra.mxu0 0
        %507 = vmatpush.bf16.msra.mxu0 0
        %508 = vmatpush.bf16.msra.mxu0 0
        %509 = vmatpush.bf16.msra.mxu0 %v500
        %510 = vmatmul.bf16.gmra.mxu0 %v496
        %v511 = vpop.f32.mrf.mxu0
        %v512 = vadd.f32 0.0, %v511
        %v513 = vpop.f32.mrf.mxu0
        %514 = vdwg.mxu0
        %v515 = vrcp.pop %v493
        %v516 = vmul.f32 %v512, %v515
        %v517 = vpack.c.bf16 %v516, %v516
        %s518 = scalar_lea.vmem %s3, 16
        %v519 = vld [vmem:[%s518] sm:$0xf]
        %v520 = vld [vmem:[%s518 + $0x4] sm:$0xf]
        %v521 = vld [vmem:[%s518 + $0x8] sm:$0xf]
        %v522 = vld [vmem:[%s518 + $0xc] sm:$0xf]
        %s523 = scalar_lea.vmem %s4, 16
        %v524 = vld [vmem:[%s523] sm:$0xf]
        %v525 = vld [vmem:[%s523 + $0x4] sm:$0xf]
        %v526 = vld [vmem:[%s523 + $0x8] sm:$0xf]
        %v527 = vld [vmem:[%s523 + $0xc] sm:$0xf]
        %s528 = scalar_lea.vmem %s5, 16
        %v529 = vld [vmem:[%s528] sm:$0xf]
        %v530 = vld [vmem:[%s528 + $0x4] sm:$0xf]
        %v531 = vld [vmem:[%s528 + $0x8] sm:$0xf]
        %v532 = vld [vmem:[%s528 + $0xc] sm:$0xf]
        %s533 = scalar_lea.vmem %s6, 4
        %v534 = vld [vmem:[%s533] sm:$0xf]
        %v539 = vunpack.c.l.b16 %v519
        %v540 = vunpack.c.l.b16 %v520
        %v541 = vunpack.c.l.b16 %v521
        %v542 = vunpack.c.l.b16 %v522
        %v543 = vpack.c.b16 %v540, %v539
        %v544 = vpack.c.b16 %v542, %v541
        %547 = vmatpush.bf16.msra.mxu0 0
        %548 = vmatpush.bf16.msra.mxu0 0
        %549 = vmatpush.bf16.msra.mxu0 0
        %550 = vmatpush.bf16.msra.mxu0 0
        %551 = vmatpush.bf16.msra.mxu0 0
        %552 = vmatpush.bf16.msra.mxu0 0
        %553 = vmatpush.bf16.msra.mxu0 %v544
        %554 = vmatpush.bf16.msra.mxu0 %v543
        %555 = vmatmul.bf16.gmra.mxu0 %v391
        %v556 = vpop.f32.mrf.mxu0
        %v557 = vadd.f32 0.0, %v556
        %v558 = vpop.f32.mrf.mxu0
        %559 = vdwg.mxu0
        %v560 = vpack.c.bf16 %v557, %v557
        %v565 = vunpack.c.l.b16 %v524
        %v566 = vunpack.c.l.b16 %v525
        %v567 = vunpack.c.l.b16 %v526
        %v568 = vunpack.c.l.b16 %v527
        %v569 = vpack.c.b16 %v566, %v565
        %v570 = vpack.c.b16 %v568, %v567
        %573 = vmatpush.bf16.msra.mxu0 0
        %574 = vmatpush.bf16.msra.mxu0 0
        %575 = vmatpush.bf16.msra.mxu0 0
        %576 = vmatpush.bf16.msra.mxu0 0
        %577 = vmatpush.bf16.msra.mxu0 0
        %578 = vmatpush.bf16.msra.mxu0 0
        %579 = vmatpush.bf16.msra.mxu0 %v570
        %580 = vmatpush.bf16.msra.mxu0 %v569
        %581 = vmatmul.bf16.gmra.mxu0 %v420
        %v582 = vpop.f32.mrf.mxu0
        %v583 = vadd.f32 0.0, %v582
        %v584 = vpop.f32.mrf.mxu0
        %585 = vdwg.mxu0
        %v586 = vpack.c.bf16 %v583, %v583
        %v591 = vunpack.c.l.b16 %v529
        %v592 = vunpack.c.l.b16 %v530
        %v593 = vunpack.c.l.b16 %v531
        %v594 = vunpack.c.l.b16 %v532
        %v595 = vpack.c.b16 %v592, %v591
        %v596 = vpack.c.b16 %v594, %v593
        %599 = vmatpush.bf16.msra.mxu0 0
        %600 = vmatpush.bf16.msra.mxu0 0
        %601 = vmatpush.bf16.msra.mxu0 0
        %602 = vmatpush.bf16.msra.mxu0 0
        %603 = vmatpush.bf16.msra.mxu0 0
        %604 = vmatpush.bf16.msra.mxu0 0
        %605 = vmatpush.bf16.msra.mxu0 %v596
        %606 = vmatpush.bf16.msra.mxu0 %v595
        %607 = vmatmul.bf16.gmra.mxu0 %v449
        %v608 = vpop.f32.mrf.mxu0
        %v609 = vadd.f32 0.0, %v608
        %v610 = vpop.f32.mrf.mxu0
        %611 = vdwg.mxu0
        %v612 = vpack.c.bf16 %v609, %v609
        %v614 = vsel %vm465, %v560, 0
        %v617 = vsel %vm465, %v586, 0
        %619 = vmatpush.bf16.xpose.msra.mxu0 0
        %620 = vmatpush.bf16.xpose.msra.mxu0 0
        %621 = vmatpush.bf16.xpose.msra.mxu0 0
        %622 = vmatpush.bf16.xpose.msra.mxu0 0
        %623 = vmatpush.bf16.xpose.msra.mxu0 0
        %624 = vmatpush.bf16.xpose.msra.mxu0 0
        %625 = vmatpush.bf16.xpose.msra.mxu0 0
        %626 = vmatpush.bf16.xpose.msra.mxu0 %v617
        %627 = vmatmul.bf16.gmra.mxu0 %v614
        %v628 = vpop.f32.mrf.mxu0
        %v629 = vadd.f32 0.0, %v628
        %v630 = vpop.f32.mrf.mxu0
        %631 = vdwg.mxu0
        %v632 = vsel %vm465, %v629, -inf
        %633 = vmax.xlane.f32.xlu0 %v632
        %v634 = vpop.xlane.xlu0 %633
        %v635 = vsub.f32 %v629, %v634
        %v636 = vmul.f32 %v635, 1.442695
        %v637 = vpow.pop %v636
        %v638 = vsel %vm465, %v637, 0.0
        %639 = vadd.xlane.f32.xlu0 %v638
        %v640 = vpop.xlane.xlu0 %639
        %v641 = vpack.c.bf16 %v637, %v637
        %v643 = vsel %vm465, %v641, 0
        %v646 = vsel %vm498, %v612, 0
        %648 = vmatpush.bf16.msra.mxu0 0
        %649 = vmatpush.bf16.msra.mxu0 0
        %650 = vmatpush.bf16.msra.mxu0 0
        %651 = vmatpush.bf16.msra.mxu0 0
        %652 = vmatpush.bf16.msra.mxu0 0
        %653 = vmatpush.bf16.msra.mxu0 0
        %654 = vmatpush.bf16.msra.mxu0 0
        %655 = vmatpush.bf16.msra.mxu0 %v646
        %656 = vmatmul.bf16.gmra.mxu0 %v643
        %v657 = vpop.f32.mrf.mxu0
        %v658 = vadd.f32 0.0, %v657
        %v659 = vpop.f32.mrf.mxu0
        %660 = vdwg.mxu0
        %v661 = vrcp.pop %v640
        %v662 = vmul.f32 %v658, %v661
        %v663 = vpack.c.bf16 %v662, %v662
        %v665 = vsel %vm465, %v663, 0
        %v668 = vsel %vm498, %v534, 0
        %670 = vmatpush.bf16.msra.mxu0 0
        %671 = vmatpush.bf16.msra.mxu0 0
        %672 = vmatpush.bf16.msra.mxu0 0
        %673 = vmatpush.bf16.msra.mxu0 0
        %674 = vmatpush.bf16.msra.mxu0 0
        %675 = vmatpush.bf16.msra.mxu0 0
        %676 = vmatpush.bf16.msra.mxu0 0
        %677 = vmatpush.bf16.msra.mxu0 %v668
        %678 = vmatmul.bf16.gmra.mxu0 %v665
        %v679 = vpop.f32.mrf.mxu0
        %v680 = vadd.f32 0.0, %v679
        %v681 = vpop.f32.mrf.mxu0
        %682 = vdwg.mxu0
        %v684 = vsel %vm465, %v517, 0
        %v687 = vsel %vm498, %v376, 0
        %689 = vmatpush.bf16.msra.mxu0 0
        %690 = vmatpush.bf16.msra.mxu0 0
        %691 = vmatpush.bf16.msra.mxu0 0
        %692 = vmatpush.bf16.msra.mxu0 0
        %693 = vmatpush.bf16.msra.mxu0 0
        %694 = vmatpush.bf16.msra.mxu0 0
        %695 = vmatpush.bf16.msra.mxu0 0
        %696 = vmatpush.bf16.msra.mxu0 %v687
        %697 = vmatmul.bf16.gmra.mxu0 %v684
        %v698 = vpop.f32.mrf.mxu0
        %v699 = vadd.f32 %v680, %v698
        %v700 = vpop.f32.mrf.mxu0
        %701 = vdwg.mxu0
        %s702 = scalar_lea.vmem %s3, 32
        %v703 = vld [vmem:[%s702] sm:$0xf]
        %v704 = vld [vmem:[%s702 + $0x4] sm:$0xf]
        %v705 = vld [vmem:[%s702 + $0x8] sm:$0xf]
        %v706 = vld [vmem:[%s702 + $0xc] sm:$0xf]
        %s707 = scalar_lea.vmem %s4, 32
        %v708 = vld [vmem:[%s707] sm:$0xf]
        %v709 = vld [vmem:[%s707 + $0x4] sm:$0xf]
        %v710 = vld [vmem:[%s707 + $0x8] sm:$0xf]
        %v711 = vld [vmem:[%s707 + $0xc] sm:$0xf]
        %s712 = scalar_lea.vmem %s5, 32
        %v713 = vld [vmem:[%s712] sm:$0xf]
        %v714 = vld [vmem:[%s712 + $0x4] sm:$0xf]
        %v715 = vld [vmem:[%s712 + $0x8] sm:$0xf]
        %v716 = vld [vmem:[%s712 + $0xc] sm:$0xf]
        %s717 = scalar_lea.vmem %s6, 8
        %v718 = vld [vmem:[%s717] sm:$0xf]
        %v723 = vunpack.c.l.b16 %v703
        %v724 = vunpack.c.l.b16 %v704
        %v725 = vunpack.c.l.b16 %v705
        %v726 = vunpack.c.l.b16 %v706
        %v727 = vpack.c.b16 %v724, %v723
        %v728 = vpack.c.b16 %v726, %v725
        %731 = vmatpush.bf16.msra.mxu0 0
        %732 = vmatpush.bf16.msra.mxu0 0
        %733 = vmatpush.bf16.msra.mxu0 0
        %734 = vmatpush.bf16.msra.mxu0 0
        %735 = vmatpush.bf16.msra.mxu0 0
        %736 = vmatpush.bf16.msra.mxu0 0
        %737 = vmatpush.bf16.msra.mxu0 %v728
        %738 = vmatpush.bf16.msra.mxu0 %v727
        %739 = vmatmul.bf16.gmra.mxu0 %v391
        %v740 = vpop.f32.mrf.mxu0
        %v741 = vadd.f32 0.0, %v740
        %v742 = vpop.f32.mrf.mxu0
        %743 = vdwg.mxu0
        %v744 = vpack.c.bf16 %v741, %v741
        %v749 = vunpack.c.l.b16 %v708
        %v750 = vunpack.c.l.b16 %v709
        %v751 = vunpack.c.l.b16 %v710
        %v752 = vunpack.c.l.b16 %v711
        %v753 = vpack.c.b16 %v750, %v749
        %v754 = vpack.c.b16 %v752, %v751
        %757 = vmatpush.bf16.msra.mxu0 0
        %758 = vmatpush.bf16.msra.mxu0 0
        %759 = vmatpush.bf16.msra.mxu0 0
        %760 = vmatpush.bf16.msra.mxu0 0
        %761 = vmatpush.bf16.msra.mxu0 0
        %762 = vmatpush.bf16.msra.mxu0 0
        %763 = vmatpush.bf16.msra.mxu0 %v754
        %764 = vmatpush.bf16.msra.mxu0 %v753
        %765 = vmatmul.bf16.gmra.mxu0 %v420
        %v766 = vpop.f32.mrf.mxu0
        %v767 = vadd.f32 0.0, %v766
        %v768 = vpop.f32.mrf.mxu0
        %769 = vdwg.mxu0
        %v770 = vpack.c.bf16 %v767, %v767
        %v775 = vunpack.c.l.b16 %v713
        %v776 = vunpack.c.l.b16 %v714
        %v777 = vunpack.c.l.b16 %v715
        %v778 = vunpack.c.l.b16 %v716
        %v779 = vpack.c.b16 %v776, %v775
        %v780 = vpack.c.b16 %v778, %v777
        %783 = vmatpush.bf16.msra.mxu0 0
        %784 = vmatpush.bf16.msra.mxu0 0
        %785 = vmatpush.bf16.msra.mxu0 0
        %786 = vmatpush.bf16.msra.mxu0 0
        %787 = vmatpush.bf16.msra.mxu0 0
        %788 = vmatpush.bf16.msra.mxu0 0
        %789 = vmatpush.bf16.msra.mxu0 %v780
        %790 = vmatpush.bf16.msra.mxu0 %v779
        %791 = vmatmul.bf16.gmra.mxu0 %v449
        %v792 = vpop.f32.mrf.mxu0
        %v793 = vadd.f32 0.0, %v792
        %v794 = vpop.f32.mrf.mxu0
        %795 = vdwg.mxu0
        %v796 = vpack.c.bf16 %v793, %v793
        %v798 = vsel %vm465, %v744, 0
        %v801 = vsel %vm465, %v770, 0
        %803 = vmatpush.bf16.xpose.msra.mxu0 0
        %804 = vmatpush.bf16.xpose.msra.mxu0 0
        %805 = vmatpush.bf16.xpose.msra.mxu0 0
        %806 = vmatpush.bf16.xpose.msra.mxu0 0
        %807 = vmatpush.bf16.xpose.msra.mxu0 0
        %808 = vmatpush.bf16.xpose.msra.mxu0 0
        %809 = vmatpush.bf16.xpose.msra.mxu0 0
        %810 = vmatpush.bf16.xpose.msra.mxu0 %v801
        %811 = vmatmul.bf16.gmra.mxu0 %v798
        %v812 = vpop.f32.mrf.mxu0
        %v813 = vadd.f32 0.0, %v812
        %v814 = vpop.f32.mrf.mxu0
        %815 = vdwg.mxu0
        %v816 = vsel %vm465, %v813, -inf
        %817 = vmax.xlane.f32.xlu0 %v816
        %v818 = vpop.xlane.xlu0 %817
        %v819 = vsub.f32 %v813, %v818
        %v820 = vmul.f32 %v819, 1.442695
        %v821 = vpow.pop %v820
        %v822 = vsel %vm465, %v821, 0.0
        %823 = vadd.xlane.f32.xlu0 %v822
        %v824 = vpop.xlane.xlu0 %823
        %v825 = vpack.c.bf16 %v821, %v821
        %v827 = vsel %vm465, %v825, 0
        %v830 = vsel %vm498, %v796, 0
        %832 = vmatpush.bf16.msra.mxu0 0
        %833 = vmatpush.bf16.msra.mxu0 0
        %834 = vmatpush.bf16.msra.mxu0 0
        %835 = vmatpush.bf16.msra.mxu0 0
        %836 = vmatpush.bf16.msra.mxu0 0
        %837 = vmatpush.bf16.msra.mxu0 0
        %838 = vmatpush.bf16.msra.mxu0 0
        %839 = vmatpush.bf16.msra.mxu0 %v830
        %840 = vmatmul.bf16.gmra.mxu0 %v827
        %v841 = vpop.f32.mrf.mxu0
        %v842 = vadd.f32 0.0, %v841
        %v843 = vpop.f32.mrf.mxu0
        %844 = vdwg.mxu0
        %v845 = vrcp.pop %v824
        %v846 = vmul.f32 %v842, %v845
        %v847 = vpack.c.bf16 %v846, %v846
        %v849 = vsel %vm465, %v847, 0
        %v852 = vsel %vm498, %v718, 0
        %854 = vmatpush.bf16.msra.mxu0 0
        %855 = vmatpush.bf16.msra.mxu0 0
        %856 = vmatpush.bf16.msra.mxu0 0
        %857 = vmatpush.bf16.msra.mxu0 0
        %858 = vmatpush.bf16.msra.mxu0 0
        %859 = vmatpush.bf16.msra.mxu0 0
        %860 = vmatpush.bf16.msra.mxu0 0
        %861 = vmatpush.bf16.msra.mxu0 %v852
        %862 = vmatmul.bf16.gmra.mxu0 %v849
        %v863 = vpop.f32.mrf.mxu0
        %v864 = vadd.f32 0.0, %v863
        %v865 = vpop.f32.mrf.mxu0
        %866 = vdwg.mxu0
        %v867 = vadd.f32 %v699, %v864
        %s868 = scalar_lea.vmem %s3, 48
        %v869 = vld [vmem:[%s868] sm:$0xf]
        %v870 = vld [vmem:[%s868 + $0x4] sm:$0xf]
        %v871 = vld [vmem:[%s868 + $0x8] sm:$0xf]
        %v872 = vld [vmem:[%s868 + $0xc] sm:$0xf]
        %s873 = scalar_lea.vmem %s4, 48
        %v874 = vld [vmem:[%s873] sm:$0xf]
        %v875 = vld [vmem:[%s873 + $0x4] sm:$0xf]
        %v876 = vld [vmem:[%s873 + $0x8] sm:$0xf]
        %v877 = vld [vmem:[%s873 + $0xc] sm:$0xf]
        %s878 = scalar_lea.vmem %s5, 48
        %v879 = vld [vmem:[%s878] sm:$0xf]
        %v880 = vld [vmem:[%s878 + $0x4] sm:$0xf]
        %v881 = vld [vmem:[%s878 + $0x8] sm:$0xf]
        %v882 = vld [vmem:[%s878 + $0xc] sm:$0xf]
        %s883 = scalar_lea.vmem %s6, 12
        %v884 = vld [vmem:[%s883] sm:$0xf]
        %v889 = vunpack.c.l.b16 %v869
        %v890 = vunpack.c.l.b16 %v870
        %v891 = vunpack.c.l.b16 %v871
        %v892 = vunpack.c.l.b16 %v872
        %v893 = vpack.c.b16 %v890, %v889
        %v894 = vpack.c.b16 %v892, %v891
        %897 = vmatpush.bf16.msra.mxu0 0
        %898 = vmatpush.bf16.msra.mxu0 0
        %899 = vmatpush.bf16.msra.mxu0 0
        %900 = vmatpush.bf16.msra.mxu0 0
        %901 = vmatpush.bf16.msra.mxu0 0
        %902 = vmatpush.bf16.msra.mxu0 0
        %903 = vmatpush.bf16.msra.mxu0 %v894
        %904 = vmatpush.bf16.msra.mxu0 %v893
        %905 = vmatmul.bf16.gmra.mxu0 %v391
        %v906 = vpop.f32.mrf.mxu0
        %v907 = vadd.f32 0.0, %v906
        %v908 = vpop.f32.mrf.mxu0
        %909 = vdwg.mxu0
        %v910 = vpack.c.bf16 %v907, %v907
        %v915 = vunpack.c.l.b16 %v874
        %v916 = vunpack.c.l.b16 %v875
        %v917 = vunpack.c.l.b16 %v876
        %v918 = vunpack.c.l.b16 %v877
        %v919 = vpack.c.b16 %v916, %v915
        %v920 = vpack.c.b16 %v918, %v917
        %923 = vmatpush.bf16.msra.mxu0 0
        %924 = vmatpush.bf16.msra.mxu0 0
        %925 = vmatpush.bf16.msra.mxu0 0
        %926 = vmatpush.bf16.msra.mxu0 0
        %927 = vmatpush.bf16.msra.mxu0 0
        %928 = vmatpush.bf16.msra.mxu0 0
        %929 = vmatpush.bf16.msra.mxu0 %v920
        %930 = vmatpush.bf16.msra.mxu0 %v919
        %931 = vmatmul.bf16.gmra.mxu0 %v420
        %v932 = vpop.f32.mrf.mxu0
        %v933 = vadd.f32 0.0, %v932
        %v934 = vpop.f32.mrf.mxu0
        %935 = vdwg.mxu0
        %v936 = vpack.c.bf16 %v933, %v933
        %v941 = vunpack.c.l.b16 %v879
        %v942 = vunpack.c.l.b16 %v880
        %v943 = vunpack.c.l.b16 %v881
        %v944 = vunpack.c.l.b16 %v882
        %v945 = vpack.c.b16 %v942, %v941
        %v946 = vpack.c.b16 %v944, %v943
        %949 = vmatpush.bf16.msra.mxu0 0
        %950 = vmatpush.bf16.msra.mxu0 0
        %951 = vmatpush.bf16.msra.mxu0 0
        %952 = vmatpush.bf16.msra.mxu0 0
        %953 = vmatpush.bf16.msra.mxu0 0
        %954 = vmatpush.bf16.msra.mxu0 0
        %955 = vmatpush.bf16.msra.mxu0 %v946
        %956 = vmatpush.bf16.msra.mxu0 %v945
        %957 = vmatmul.bf16.gmra.mxu0 %v449
        %v958 = vpop.f32.mrf.mxu0
        %v959 = vadd.f32 0.0, %v958
        %v960 = vpop.f32.mrf.mxu0
        %961 = vdwg.mxu0
        %v962 = vpack.c.bf16 %v959, %v959
        %v964 = vsel %vm465, %v910, 0
        %v967 = vsel %vm465, %v936, 0
        %969 = vmatpush.bf16.xpose.msra.mxu0 0
        %970 = vmatpush.bf16.xpose.msra.mxu0 0
        %971 = vmatpush.bf16.xpose.msra.mxu0 0
        %972 = vmatpush.bf16.xpose.msra.mxu0 0
        %973 = vmatpush.bf16.xpose.msra.mxu0 0
        %974 = vmatpush.bf16.xpose.msra.mxu0 0
        %975 = vmatpush.bf16.xpose.msra.mxu0 0
        %976 = vmatpush.bf16.xpose.msra.mxu0 %v967
        %977 = vmatmul.bf16.gmra.mxu0 %v964
        %v978 = vpop.f32.mrf.mxu0
        %v979 = vadd.f32 0.0, %v978
        %v980 = vpop.f32.mrf.mxu0
        %981 = vdwg.mxu0
        %v982 = vsel %vm465, %v979, -inf
        %983 = vmax.xlane.f32.xlu0 %v982
        %v984 = vpop.xlane.xlu0 %983
        %v985 = vsub.f32 %v979, %v984
        %v986 = vmul.f32 %v985, 1.442695
        %v987 = vpow.pop %v986
        %v988 = vsel %vm465, %v987, 0.0
        %989 = vadd.xlane.f32.xlu0 %v988
        %v990 = vpop.xlane.xlu0 %989
        %v991 = vpack.c.bf16 %v987, %v987
        %v993 = vsel %vm465, %v991, 0
        %v996 = vsel %vm498, %v962, 0
        %998 = vmatpush.bf16.msra.mxu0 0
        %999 = vmatpush.bf16.msra.mxu0 0
        %1000 = vmatpush.bf16.msra.mxu0 0
        %1001 = vmatpush.bf16.msra.mxu0 0
        %1002 = vmatpush.bf16.msra.mxu0 0
        %1003 = vmatpush.bf16.msra.mxu0 0
        %1004 = vmatpush.bf16.msra.mxu0 0
        %1005 = vmatpush.bf16.msra.mxu0 %v996
        %1006 = vmatmul.bf16.gmra.mxu0 %v993
        %v1007 = vpop.f32.mrf.mxu0
        %v1008 = vadd.f32 0.0, %v1007
        %v1009 = vpop.f32.mrf.mxu0
        %1010 = vdwg.mxu0
        %v1011 = vrcp.pop %v990
        %v1012 = vmul.f32 %v1008, %v1011
        %v1013 = vpack.c.bf16 %v1012, %v1012
        %v1015 = vsel %vm465, %v1013, 0
        %v1018 = vsel %vm498, %v884, 0
        %1020 = vmatpush.bf16.msra.mxu0 0
        %1021 = vmatpush.bf16.msra.mxu0 0
        %1022 = vmatpush.bf16.msra.mxu0 0
        %1023 = vmatpush.bf16.msra.mxu0 0
        %1024 = vmatpush.bf16.msra.mxu0 0
        %1025 = vmatpush.bf16.msra.mxu0 0
        %1026 = vmatpush.bf16.msra.mxu0 0
        %1027 = vmatpush.bf16.msra.mxu0 %v1018
        %1028 = vmatmul.bf16.gmra.mxu0 %v1015
        %v1029 = vpop.f32.mrf.mxu0
        %v1030 = vadd.f32 0.0, %v1029
        %v1031 = vpop.f32.mrf.mxu0
        %1032 = vdwg.mxu0
        %v1033 = vadd.f32 %v867, %v1030
        %v1034 = vld [vmem:[%s7] sm:$0x1]
        %v1036 = vperm.slane %v1034, 0
        %v1038 = vadd.f32 %v1033, %v1036
        %1039 = vst [vmem:[%s344] sm:$0xff] %v1038
        %s1040 = sand.u32 %s229, 1
        %s1041 = scalar_lea.sflag [#allocation3], %s1040
        %s1042 = sand.u32 %s229, 1
        %s1043 = smul.addr %s1042, 8
        %s1044 = scalar_lea.vmem [#allocation2], %s1043
        // Predicated region
        $region53: #{tpu_custom_call.1} parent=51 // pred_check
          %p1045 = pneg %p239
        $region54: #{tpu_custom_call.1} parent=51 // pred_check_branch
          %1047 = sbr.rel (%p1045) target = $region56
        $region55: #{tpu_custom_call.1} parent=51 // pred_region
          %1049 = vsyncadd %s1041, 0
          %s1050 = sadd.s32 %s27, %s26
          %s1051 = smul.addr %s1050, 8
          %s1052 = scalar_lea.hbm %s8, %s1051
          %s1054 = sshll.u32 %s1044, 4
          %s1055 = int_to_ptr.vmem [resolvable:$true] %s1054
          %s1056 = sshll.u32 %s1052, 4
          %s1057 = int_to_ptr.hbm [resolvable:$true] %s1056
          %1059 = dma.vmem_to_hbm [thread:$0]  %s1055, 128, %s1057, %s1041
        $region56: #{tpu_custom_call.1} parent=51 // pred_fallthru
          _
      $region52: #{tpu_custom_call.1} parent=5 // pred_fallthru
        _
      %p1060 = scmp.le.s32.totalorder 2, %s17
      // Predicated region
      $region57: #{tpu_custom_call.1} parent=5 // pred_check
        %p1061 = pneg %p1060
      $region58: #{tpu_custom_call.1} parent=5 // pred_check_branch
        %1063 = sbr.rel (%p1061) target = $region60
      $region59: #{tpu_custom_call.1} parent=5 // pred_region
        %s1064 = ssub.s32 %s17, 2
        // Predicated region
        $region61: #{tpu_custom_call.1} parent=59 // pred_check
          %p1065 = pneg %p245
        $region62: #{tpu_custom_call.1} parent=59 // pred_check_branch
          %1067 = sbr.rel (%p1065) target = $region64
        $region63: #{tpu_custom_call.1} parent=59 // pred_region
          %s1068 = sand.u32 %s230, 1
          %s1069 = scalar_lea.sflag [#allocation3], %s1068
          %s1070 = sand.u32 %s230, 1
          %s1071 = smul.addr %s1070, 8
          %s1072 = scalar_lea.vmem [#allocation2], %s1071
          %1074 = dma.done %s1069, 128
        $region64: #{tpu_custom_call.1} parent=59 // pred_fallthru
          _
      $region60: #{tpu_custom_call.1} parent=5 // pred_fallthru
        _
    $region6: #{tpu_custom_call.1} parent=1 // loop_footer
      %s21 = sadd.s32 1, %s17
    $region7: #{tpu_custom_call.1} parent=1 // loop_footer_branch
      %16 = sbr.rel target = $region3
    $region8: #{tpu_custom_call.1} parent=1 // loop_exit
      _
    %1075 = vsyncpa [#allocation3], 1
    %s1076 = scalar_lea.sflag [#allocation3], 1
    %1077 = vsyncpa %s1076, 1

</llo_original>
